<compile_context>
chip_gen: v6e
topology: v6e:2x2x1
jax: 0.10.0
libtpu: 0.0.40
codegen_flags: <defaults>
</compile_context>

<pallas_src>
import jax
import jax.numpy as jnp
from jax.experimental import pallas as pl
from jax.experimental.pallas import tpu as pltpu


def _round_up(n, m):
    return ((n + m - 1) // m) * m


def _linear_kernel(w_ref, b_ref, x_ref, o_ref):
    # w_ref: VMEM (D, 1)   b_ref: SMEM (1,)
    # x_ref: VMEM (D, T) -- features on sublanes, batch tile on lanes
    # o_ref: VMEM (1, T) -- lane-dense output
    acc = jnp.sum(x_ref[...] * w_ref[...], axis=0, keepdims=True)  # VPU mul + XLU reduce
    o_ref[...] = (acc + b_ref[0]).astype(o_ref.dtype)


def linear_forward(x, weight, bias, *, max_tile=131072, min_grid_steps=2,
                   x_is_feature_major=False):
    """nn.Linear(D, 1) forward.

    x: (B, D) float32 (PyTorch layout), or (D, B) if x_is_feature_major=True.
    weight: (1, D) (PyTorch layout); bias: (1,). Returns (B, 1).
    """
    if x_is_feature_major:
        D, B = x.shape
        xt = x
    else:
        B, D = x.shape
        xt = x.T  # fuses with the pad below into a single XLA pass

    max_tile = _round_up(max(int(max_tile), 128), 128)  # keep user-supplied caps lane-aligned

    # --- tile / grid selection -------------------------------------------------
    Bp0 = _round_up(B, 128)                                    # minimal lane padding
    n128 = Bp0 // 128
    # enough steps to respect the tile cap; >=2 steps (if batch allows) for v7x megacore
    steps = max(pl.cdiv(Bp0, max_tile), min(min_grid_steps, n128))
    tile = _round_up(pl.cdiv(Bp0, steps), 128)                 # tiles divide Bp ~evenly
    Bp = tile * steps

    if Bp != B:
        xt = jnp.pad(xt, ((0, 0), (0, Bp - B)))                # single fused pad

    w_col = weight.reshape(D, 1).astype(jnp.float32)           # VMEM weight column
    b = bias.reshape(1).astype(jnp.float32)                    # SMEM scalar

    out = pl.pallas_call(
        _linear_kernel,
        out_shape=jax.ShapeDtypeStruct((1, Bp), x.dtype),
        grid_spec=pltpu.PrefetchScalarGridSpec(
            num_scalar_prefetch=0,
            grid=(steps,),
            in_specs=[
                pl.BlockSpec((D, 1), lambda i: (0, 0)),                # weight column (resident)
                pl.BlockSpec(memory_space=pltpu.MemorySpace.SMEM),     # bias (1,)
                pl.BlockSpec((D, tile), lambda i: (0, i)),             # x tile (D, T)
            ],
            out_specs=pl.BlockSpec((1, tile), lambda i: (0, i)),       # y tile (1, T)
        ),
        compiler_params=pltpu.CompilerParams(
            dimension_semantics=("parallel",),   # batch axis shards across v7x's 2 TCs
            vmem_limit_bytes=32 << 20,           # headroom for 131072-lane tiles on v5e
        ),
    )(w_col, b, xt)

    # Back to the PyTorch output layout (B, 1).
    return out[0, :B].reshape(B, 1)


if __name__ == "__main__":
    input_dim = 5

    key = jax.random.PRNGKey(0)
    kx, kw, kb, kx2 = jax.random.split(key, 4)

    # Same parameter shapes as nn.Linear(5, 1): weight (1, 5), bias (1,)
    bound = 1.0 / (input_dim ** 0.5)
    weight = jax.random.uniform(kw, (1, input_dim), jnp.float32, -bound, bound)
    bias = jax.random.uniform(kb, (1,), jnp.float32, -bound, bound)

    # Lane-dense batch: tile=128, grid=(2,) -> exercises pipeline + megacore split.
    batch = 256
    x = jax.random.normal(kx, (batch, input_dim), jnp.float32)
    y = linear_forward(x, weight, bias)
    jax.block_until_ready(y)
    y_ref = x @ weight.T + bias
    assert y.shape == (batch, 1)
    assert jnp.allclose(y, y_ref, atol=1e-5, rtol=1e-5)

    # Ragged batch -> exercises the minimal-pad + slice tail handling.
    batch2 = 193
    x2 = jax.random.normal(kx2, (batch2, input_dim), jnp.float32)
    y2 = linear_forward(x2, weight, bias)
    jax.block_until_ready(y2)
    y2_ref = x2 @ weight.T + bias
    assert y2.shape == (batch2, 1)
    assert jnp.allclose(y2, y2_ref, atol=1e-5, rtol=1e-5)

    print("KERNEL_OK")
</pallas_src>

<mosaic_0001>
module attributes {stable_mosaic.version = 11 : i64} {
  func.func @_linear_kernel(%arg0: i32, %arg1: memref<5x1xf32, #tpu.memory_space<vmem>>, %arg2: memref<1xf32, #tpu.memory_space<smem>>, %arg3: memref<5x128xf32, #tpu.memory_space<vmem>>, %arg4: memref<1x128xf32, #tpu.memory_space<vmem>>) attributes {dimension_semantics = [#tpu.dimension_semantics<parallel>], iteration_bounds = array<i64: 2>, scalar_prefetch = 0 : i64, scratch_operands = 0 : i64, tpu.core_type = #tpu.core_type<tc>, window_params = [{pipeline_mode = #tpu.pipeline_mode<synchronous>, transform_indices = @transform_0, window_bounds = array<i64: 5, 1>}, {transform_indices = @transform_1, window_bounds = array<i64: 1>}, {transform_indices = @transform_2, window_bounds = array<i64: 5, 128>}, {transform_indices = @transform_3, window_bounds = array<i64: 1, 128>}]} {
    %c0 = arith.constant 0 : index
    %c0_0 = arith.constant 0 : index
    %0 = vector.load %arg3[%c0, %c0_0] : memref<5x128xf32, #tpu.memory_space<vmem>>, vector<5x128xf32>
    %c0_1 = arith.constant 0 : index
    %c0_2 = arith.constant 0 : index
    %1 = vector.load %arg1[%c0_1, %c0_2] : memref<5x1xf32, #tpu.memory_space<vmem>>, vector<5x1xf32>
    %2 = vector.broadcast %1 : vector<5x1xf32> to vector<5x128xf32>
    %3 = arith.mulf %0, %2 : vector<5x128xf32>
    %cst = arith.constant dense<0.000000e+00> : vector<128xf32>
    %4 = vector.multi_reduction <add>, %3, %cst [0] : vector<5x128xf32> to vector<128xf32>
    %5 = vector.shape_cast %4 : vector<128xf32> to vector<1x128xf32>
    %c0_3 = arith.constant 0 : index
    %6 = memref.load %arg2[%c0_3] : memref<1xf32, #tpu.memory_space<smem>>
    %7 = vector.broadcast %6 : f32 to vector<1x128xf32>
    %8 = arith.addf %5, %7 : vector<1x128xf32>
    %c0_4 = arith.constant 0 : index
    %c0_5 = arith.constant 0 : index
    %9 = vector.load %arg4[%c0_4, %c0_5] : memref<1x128xf32, #tpu.memory_space<vmem>>, vector<1x128xf32>
    tpu.vector_store %arg4[%c0_4, %c0_5], %8 {strides = array<i32>} : memref<1x128xf32, #tpu.memory_space<vmem>>, vector<1x128xf32>,
    return
  }
  func.func @transform_0(%arg0: i32) -> (i32, i32) {
    %c0_i32 = arith.constant 0 : i32
    %c0_i32_0 = arith.constant 0 : i32
    %c0_i32_1 = arith.constant 0 : i32
    return %c0_i32, %c0_i32_0 : i32, i32
  }
  func.func @transform_1(%arg0: i32) -> i32 {
    %c0_i32 = arith.constant 0 : i32
    %c0_i32_0 = arith.constant 0 : i32
    return %c0_i32 : i32
  }
  func.func @transform_2(%arg0: i32) -> (i32, i32) {
    %c0_i32 = arith.constant 0 : i32
    %c0_i32_0 = arith.constant 0 : i32
    return %c0_i32, %arg0 : i32, i32
  }
  func.func @transform_3(%arg0: i32) -> (i32, i32) {
    %c0_i32 = arith.constant 0 : i32
    %c0_i32_0 = arith.constant 0 : i32
    return %c0_i32, %arg0 : i32, i32
  }
}

</mosaic_0001>

<llo_original>
// kernel: tpu_custom_call.1
$region0: #{tpu_custom_call.1}
  #allocation0 [shape = 'u32[]', space=smem, size = 0x4, offset = 0x4, fixed_abs, tag = 'smem constant byte address 0x4 - core index']
  #allocation1 [shape = 'u32[144,128]{1,0:T(1,128)}', space=vmem, size = 0x12000, scoped, tag = 'internal scratch']
  #allocation2 [shape = 'f32[1]{0:T(128)S(6)}', space=smem, size = 0x200, scoped, tag = 'scoped memory for tpu_custom_call.1']
  %s0 = inlined_call_operand.vmem [shape: f32[5,1], index: 0, kind: input, shape index: {}]
  %s1 = inlined_call_operand.<no memory space> [shape: f32[1], index: 1, kind: input, shape index: {}]
  %s2 = inlined_call_operand.hbm [shape: f32[5,256], index: 2, kind: input, shape index: {}]
  %s3 = inlined_call_operand.hbm [shape: f32[1,256], index: 3, kind: output, shape index: {}]
  %s4 = sld [smem:[#allocation0]]
  $region49: #{tpu_custom_call.1} parent=0
    _
  %s6 = ssub.s32 1, %s4
  %s7 = scalar_select 0, %s6, %s4
  %8 = sst [smem:[#allocation2]] %s1
  $region1: #{tpu_custom_call.1} parent=0
    #allocation3 [shape = 'u8[8192]{0}', space=vmem, size = 0x2000, scoped, tag = 'input window, operand 2']
    #allocation4 [shape = 's32[2]{0}', space=sflag, size = 0x8, scoped, tag = 'scoped memory for tpu_custom_call.1']
    #allocation5 [shape = 's32[2]{0}', space=sflag, size = 0x8, scoped, tag = 'scoped memory for tpu_custom_call.1']
    #allocation6 [shape = 'u8[1024]{0}', space=vmem, size = 0x400, scoped, tag = 'output window, operand 0']
    %9 = vsyncpa [#allocation4], 0
    %s10 = scalar_lea.sflag [#allocation4], 1
    %11 = vsyncpa %s10, 0
    %12 = vsyncpa [#allocation5], 0
    %s13 = scalar_lea.sflag [#allocation5], 1
    %14 = vsyncpa %s13, 0
    loop: start=0, step=1, limit=4
    $region2: #{tpu_custom_call.1} parent=1 // loop_pre_header
      _
    $region3: #{tpu_custom_call.1} parent=1 // loop_header
      %s16 = sphi 0, %s20
      %p17 = scmp.ge.s32.totalorder %s16, 4
      %s24 = sphi 0, %s24
      %s26 = sphi 0, %s24
      %s27 = sphi 0, %s26
      %s41 = sphi 0, %s27
      %s45 = sphi 0, %s45
      %s47 = sphi 0, %s45
      %s48 = sphi 0, %s47
      %s62 = sphi 0, %s48
      %s68 = sphi 0, %s70
      %s71 = sphi 0, %s68
      %s72 = sphi 0, %s71
      %s88 = sphi 0, %s72
      %s94 = sphi 0, %s96
      %s97 = sphi 0, %s94
      %s98 = sphi 0, %s97
      %s114 = sphi 0, %s98
    $region4: #{tpu_custom_call.1} parent=1 // loop_header_branch
      %19 = sbr.rel (%p17) target = $region8
    $region5: #{tpu_custom_call.1} parent=1 // loop_body
      %s21 = ssub.s32 %s16, 1
      %s22 = ssub.s32 %s16, 2
      %s23 = sadd.s32 %s16, 1
      %s25 = sadd.s32 %s24, 1
      %p28 = scmp.eq.s32.totalorder %s16, 1
      %p29 = scmp.ne.s32.totalorder %s24, %s26
      %p30 = scmp.eq.s32.totalorder %s16, 0
      %p31 = por %p29, %p30
      %p32 = scmp.ne.s32.totalorder %s24, %s26
      %p33 = scmp.eq.s32.totalorder %s21, 1
      %p34 = por %p32, %p33
      %p35 = scmp.ne.s32.totalorder %s26, %s27
      %p36 = scmp.eq.s32.totalorder %s21, 0
      %p37 = por %p35, %p36
      %p38 = scmp.ne.s32.totalorder %s26, %s27
      %p39 = scmp.eq.s32.totalorder %s22, 1
      %p40 = por %p38, %p39
      %p42 = scmp.ne.s32.totalorder %s27, %s41
      %p43 = scmp.eq.s32.totalorder %s22, 0
      %p44 = por %p42, %p43
      %s46 = sadd.s32 %s45, 1
      %p49 = scmp.eq.s32.totalorder %s16, 1
      %p50 = scmp.ne.s32.totalorder %s45, %s47
      %p51 = scmp.eq.s32.totalorder %s16, 0
      %p52 = por %p50, %p51
      %p53 = scmp.ne.s32.totalorder %s45, %s47
      %p54 = scmp.eq.s32.totalorder %s21, 1
      %p55 = por %p53, %p54
      %p56 = scmp.ne.s32.totalorder %s47, %s48
      %p57 = scmp.eq.s32.totalorder %s21, 0
      %p58 = por %p56, %p57
      %p59 = scmp.ne.s32.totalorder %s47, %s48
      %p60 = scmp.eq.s32.totalorder %s22, 1
      %p61 = por %p59, %p60
      %p63 = scmp.ne.s32.totalorder %s48, %s62
      %p64 = scmp.eq.s32.totalorder %s22, 0
      %p65 = por %p63, %p64
      %s66 = ssub.s32 %s16, %s23
      %p67 = scmp.eq.s32.totalorder %s66, 0
      %s69 = sadd.s32 %s68, 1
      %s70 = scalar_select %p67, %s68, %s69
      %p73 = pneg %p67
      %p74 = scmp.eq.s32.totalorder %s16, 1
      %p75 = por %p73, %p74
      %p76 = scmp.ne.s32.totalorder %s68, %s71
      %p77 = scmp.eq.s32.totalorder %s16, 0
      %p78 = por %p76, %p77
      %p79 = scmp.ne.s32.totalorder %s68, %s71
      %p80 = scmp.eq.s32.totalorder %s21, 1
      %p81 = por %p79, %p80
      %p82 = scmp.ne.s32.totalorder %s71, %s72
      %p83 = scmp.eq.s32.totalorder %s21, 0
      %p84 = por %p82, %p83
      %p85 = scmp.ne.s32.totalorder %s71, %s72
      %p86 = scmp.eq.s32.totalorder %s22, 1
      %p87 = por %p85, %p86
      %p89 = scmp.ne.s32.totalorder %s72, %s88
      %p90 = scmp.eq.s32.totalorder %s22, 0
      %p91 = por %p89, %p90
      %s92 = ssub.s32 %s16, %s23
      %p93 = scmp.eq.s32.totalorder %s92, 0
      %s95 = sadd.s32 %s94, 1
      %s96 = scalar_select %p93, %s94, %s95
      %p99 = pneg %p93
      %p100 = scmp.eq.s32.totalorder %s16, 1
      %p101 = por %p99, %p100
      %p102 = scmp.ne.s32.totalorder %s94, %s97
      %p103 = scmp.eq.s32.totalorder %s16, 0
      %p104 = por %p102, %p103
      %p105 = scmp.ne.s32.totalorder %s94, %s97
      %p106 = scmp.eq.s32.totalorder %s21, 1
      %p107 = por %p105, %p106
      %p108 = scmp.ne.s32.totalorder %s97, %s98
      %p109 = scmp.eq.s32.totalorder %s21, 0
      %p110 = por %p108, %p109
      %p111 = scmp.ne.s32.totalorder %s97, %s98
      %p112 = scmp.eq.s32.totalorder %s22, 1
      %p113 = por %p111, %p112
      %p115 = scmp.ne.s32.totalorder %s98, %s114
      %p116 = scmp.eq.s32.totalorder %s22, 0
      %p117 = por %p115, %p116
      %p118 = scmp.le.s32.totalorder 1, %s16
      %p119 = scmp.lt.s32.totalorder %s16, 3
      %p120 = pnand %p118, %p119
      %p121 = pneg %p120
      // Predicated region
      $region9: #{tpu_custom_call.1} parent=5 // pred_check
        _
      $region10: #{tpu_custom_call.1} parent=5 // pred_check_branch
        %123 = sbr.rel (%p120) target = $region12
      $region11: #{tpu_custom_call.1} parent=5 // pred_region
        %s124 = ssub.s32 %s16, 1
        // Predicated region
        $region13: #{tpu_custom_call.1} parent=11 // pred_check
          %p125 = pneg %p37
        $region14: #{tpu_custom_call.1} parent=11 // pred_check_branch
          %127 = sbr.rel (%p125) target = $region16
        $region15: #{tpu_custom_call.1} parent=11 // pred_region
          _
        $region16: #{tpu_custom_call.1} parent=11 // pred_fallthru
          _
        // Predicated region
        $region17: #{tpu_custom_call.1} parent=11 // pred_check
          %p128 = pneg %p58
        $region18: #{tpu_custom_call.1} parent=11 // pred_check_branch
          %130 = sbr.rel (%p128) target = $region20
        $region19: #{tpu_custom_call.1} parent=11 // pred_region
          _
        $region20: #{tpu_custom_call.1} parent=11 // pred_fallthru
          _
      $region12: #{tpu_custom_call.1} parent=5 // pred_fallthru
        _
      %p131 = scmp.lt.s32.totalorder %s16, 2
      // Predicated region
      $region21: #{tpu_custom_call.1} parent=5 // pred_check
        %p132 = pneg %p131
      $region22: #{tpu_custom_call.1} parent=5 // pred_check_branch
        %134 = sbr.rel (%p132) target = $region24
      $region23: #{tpu_custom_call.1} parent=5 // pred_region
        // Predicated region
        $region25: #{tpu_custom_call.1} parent=23 // pred_check
          %p135 = pneg %p78
        $region26: #{tpu_custom_call.1} parent=23 // pred_check_branch
          %137 = sbr.rel (%p135) target = $region28
        $region27: #{tpu_custom_call.1} parent=23 // pred_region
          %s138 = sand.u32 %s68, 1
          %s139 = scalar_lea.sflag [#allocation4], %s138
          %s140 = sand.u32 %s68, 1
          %s141 = smul.addr %s140, 8
          %s142 = scalar_lea.vmem [#allocation3], %s141
          %s144 = ssub.s32 128, 128
          %145 = vsyncadd %s139, %s144
          %s146 = smul.addr %s16, 128
          %s147 = scalar_lea.hbm %s2, %s146
          %s149 = sshll.u32 %s142, 4
          %s150 = int_to_ptr.vmem [resolvable:$true] %s149
          %152 = dma.hbm_to_vmem [thread:$0]  %s147, 128, %s150, %s139
        $region28: #{tpu_custom_call.1} parent=23 // pred_fallthru
          _
      $region24: #{tpu_custom_call.1} parent=5 // pred_fallthru
        _
      %p153 = scmp.le.s32.totalorder 1, %s16
      %p154 = scmp.lt.s32.totalorder %s16, 3
      %p155 = pnand %p153, %p154
      %p156 = pneg %p155
      // Predicated region
      $region29: #{tpu_custom_call.1} parent=5 // pred_check
        _
      $region30: #{tpu_custom_call.1} parent=5 // pred_check_branch
        %158 = sbr.rel (%p155) target = $region32
      $region31: #{tpu_custom_call.1} parent=5 // pred_region
        %s159 = ssub.s32 %s16, 1
        %s160 = sand.u32 %s71, 1
        %s161 = scalar_lea.sflag [#allocation4], %s160
        %s162 = sand.u32 %s71, 1
        %s163 = smul.addr %s162, 8
        %s164 = scalar_lea.vmem [#allocation3], %s163
        // Predicated region
        $region33: #{tpu_custom_call.1} parent=31 // pred_check
          %p165 = pneg %p84
        $region34: #{tpu_custom_call.1} parent=31 // pred_check_branch
          %167 = sbr.rel (%p165) target = $region36
        $region35: #{tpu_custom_call.1} parent=31 // pred_region
          %168 = dma.done %s161, 128
        $region36: #{tpu_custom_call.1} parent=31 // pred_fallthru
          _
        %p169 = pneg %p37
        %p170 = pneg %p34
        %p171 = pneg %p58
        %p172 = pneg %p55
        %s173 = sand.u32 %s71, 1
        %s174 = scalar_lea.sflag [#allocation4], %s173
        %s175 = sand.u32 %s71, 1
        %s176 = smul.addr %s175, 8
        %s177 = scalar_lea.vmem [#allocation3], %s176
        %p178 = pneg %p84
        %p179 = pneg %p81
        %p180 = pneg %p110
        %p181 = pneg %p107
        %s182 = sand.u32 %s97, 1
        %s183 = scalar_lea.sflag [#allocation5], %s182
        %s184 = sand.u32 %s97, 1
        %s185 = scalar_lea.vmem [#allocation6], %s184
        %v186 = vld [vmem:[%s164] sm:$0x1f]
        %v187 = vld [vmem:[%s0] sm:$0x1f]
        %189 = vset.pattern.permute.xlu0 0
        %190 = vperm.xlu0 %189, %v187
        %v191 = vpop.permute.xlu0 %190
        %v193 = vmul.f32 %v186, %v191
        %vm194 = vcmask 1044480
        %v195 = vsel %vm194, %v193, 0.0
        %v196 = vrot.slane %v195, 4
        %v197 = vadd.f32 %v195, %v196
        %v198 = vrot.slane %v197, 2
        %v199 = vadd.f32 %v197, %v198
        %v200 = vrot.slane %v199, 1
        %v201 = vadd.f32 %v199, %v200
        %s202 = sld [smem:[#allocation2]]
        %v203 = vstv %s202
        %v204 = vadd.f32 %v201, %v203
        %205 = vst [vmem:[%s185] sm:$0x1] %v204
        %s206 = sand.u32 %s97, 1
        %s207 = scalar_lea.sflag [#allocation5], %s206
        %s208 = sand.u32 %s97, 1
        %s209 = scalar_lea.vmem [#allocation6], %s208
        // Predicated region
        $region37: #{tpu_custom_call.1} parent=31 // pred_check
          %p210 = pneg %p107
        $region38: #{tpu_custom_call.1} parent=31 // pred_check_branch
          %212 = sbr.rel (%p210) target = $region40
        $region39: #{tpu_custom_call.1} parent=31 // pred_region
          %s214 = ssub.s32 16, 16
          %215 = vsyncadd %s207, %s214
          %s216 = smul.addr %s21, 16
          %s217 = scalar_lea.hbm %s3, %s216
          %s219 = sshll.u32 %s209, 4
          %s220 = int_to_ptr.vmem [resolvable:$true] %s219
          %222 = dma.vmem_to_hbm [thread:$0]  %s220, 16, %s217, %s207
        $region40: #{tpu_custom_call.1} parent=31 // pred_fallthru
          _
      $region32: #{tpu_custom_call.1} parent=5 // pred_fallthru
        _
      %p223 = scmp.le.s32.totalorder 2, %s16
      // Predicated region
      $region41: #{tpu_custom_call.1} parent=5 // pred_check
        %p224 = pneg %p223
      $region42: #{tpu_custom_call.1} parent=5 // pred_check_branch
        %226 = sbr.rel (%p224) target = $region44
      $region43: #{tpu_custom_call.1} parent=5 // pred_region
        %s227 = ssub.s32 %s16, 2
        // Predicated region
        $region45: #{tpu_custom_call.1} parent=43 // pred_check
          %p228 = pneg %p113
        $region46: #{tpu_custom_call.1} parent=43 // pred_check_branch
          %230 = sbr.rel (%p228) target = $region48
        $region47: #{tpu_custom_call.1} parent=43 // pred_region
          %s231 = sand.u32 %s98, 1
          %s232 = scalar_lea.sflag [#allocation5], %s231
          %s233 = sand.u32 %s98, 1
          %s234 = scalar_lea.vmem [#allocation6], %s233
          %235 = dma.done %s232, 16
        $region48: #{tpu_custom_call.1} parent=43 // pred_fallthru
          _
      $region44: #{tpu_custom_call.1} parent=5 // pred_fallthru
        _
    $region6: #{tpu_custom_call.1} parent=1 // loop_footer
      %s20 = sadd.s32 1, %s16
    $region7: #{tpu_custom_call.1} parent=1 // loop_footer_branch
      %15 = sbr.rel target = $region3
    $region8: #{tpu_custom_call.1} parent=1 // loop_exit
      _
    %236 = vsyncpa [#allocation4], 1
    %s237 = scalar_lea.sflag [#allocation4], 1
    %238 = vsyncpa %s237, 1
    %239 = vsyncpa [#allocation5], 1
    %s240 = scalar_lea.sflag [#allocation5], 1
    %241 = vsyncpa %s240, 1

</llo_original>
